<compile_context>
chip_gen: v6e
topology: v6e:2x2x1
jax: 0.10.0
libtpu: 0.0.40
codegen_flags: <defaults>
</compile_context>

<pallas_src>
import functools

import jax
import jax.numpy as jnp
from jax import lax
from jax.experimental import pallas as pl
from jax.experimental.pallas import tpu as pltpu

EPS = 1e-5  # torch.nn.LayerNorm default eps


def _round_up(x, m):
    return (x + m - 1) // m * m


# ----------------------------------------------------------------------------
# Path 1: table resident in VMEM, one-hot MXU gather + fused LayerNorm.
# ----------------------------------------------------------------------------
def _resident_kernel(idx_ref, emb_ref, gamma_ref, beta_ref, out_ref, *, inv_d):
    # idx_ref:   (T, 1)         int32 token ids for this token block
    # emb_ref:   (V_res, D_pad) whole (padded) table, DMA'd once (index const)
    # gamma_ref: (1, D_pad)     LayerNorm weight (zero in padded columns)
    # beta_ref:  (1, D_pad)     LayerNorm bias   (zero in padded columns)
    # out_ref:   (T, D_pad)     lane-dense output tile
    ids = idx_ref[...]                                   # (T, 1)
    t = ids.shape[0]
    v = emb_ref.shape[0]

    # Exact one-hot gather on the MXU: entries are 0/1, one match per row.
    onehot = lax.broadcasted_iota(jnp.int32, (t, v), 1) == ids
    x = jnp.dot(onehot.astype(emb_ref.dtype), emb_ref[...],
                preferred_element_type=jnp.float32)      # (T, D_pad) f32

    # Fused single-pass LayerNorm (padded columns are exactly zero).
    s1 = jnp.sum(x, axis=-1, keepdims=True)
    s2 = jnp.sum(x * x, axis=-1, keepdims=True)
    mean = s1 * inv_d
    var = jnp.maximum(s2 * inv_d - mean * mean, 0.0)
    inv = lax.rsqrt(var + EPS)
    y = (x - mean) * inv * gamma_ref[...] + beta_ref[...]
    out_ref[...] = y.astype(out_ref.dtype)


# ----------------------------------------------------------------------------
# Path 2: table stays in HBM; manual per-row DMA gather + fused LayerNorm.
# ----------------------------------------------------------------------------
def _gather_kernel(idx_ref, emb_hbm, gamma_ref, beta_ref, out_ref,
                   rows_ref, sem_ref, *, inv_d, block_tokens):
    # idx_ref:   (N_pad,)   int32 ids, scalar-prefetched into SMEM
    # emb_hbm:   (V, D_pad) embedding table left in HBM (memory_space=ANY)
    # out_ref:   (T, D_pad) output tile
    # rows_ref:  (T, D_pad) VMEM scratch holding the gathered rows
    # sem_ref:   (1,)       DMA semaphore shared (byte-counting) by all copies
    base = pl.program_id(0) * block_tokens

    def issue(t, carry):
        row = idx_ref[base + t]
        pltpu.make_async_copy(emb_hbm.at[row], rows_ref.at[t],
                              sem_ref.at[0]).start()
        return carry

    lax.fori_loop(0, block_tokens, issue, 0)

    def drain(t, carry):
        # Same-sized descriptor: waits for one row's worth of bytes.
        pltpu.make_async_copy(emb_hbm.at[0], rows_ref.at[t],
                              sem_ref.at[0]).wait()
        return carry

    lax.fori_loop(0, block_tokens, drain, 0)

    x = rows_ref[...].astype(jnp.float32)                # (T, D_pad)
    s1 = jnp.sum(x, axis=-1, keepdims=True)
    s2 = jnp.sum(x * x, axis=-1, keepdims=True)
    mean = s1 * inv_d
    var = jnp.maximum(s2 * inv_d - mean * mean, 0.0)
    inv = lax.rsqrt(var + EPS)
    y = (x - mean) * inv * gamma_ref[...] + beta_ref[...]
    out_ref[...] = y.astype(out_ref.dtype)


# ----------------------------------------------------------------------------
# Wrapper
# ----------------------------------------------------------------------------
def _vmem_ceiling_bytes():
    """Generation-aware scoped-VMEM ceiling with headroom for the compiler."""
    try:
        cap = pltpu.get_tpu_info().vmem_capacity_bytes
    except Exception:
        cap = 64 * 1024 * 1024          # conservative (v7x physical VMEM)
    return int(min(40 * 1024 * 1024, cap // 2))


def category_value_encoder(idx, emb_weight, gamma, beta, *,
                           block_tokens=256, out_dtype=jnp.float32,
                           table_strategy=None):
    """Pallas equivalent of CategoryValueEncoder.forward.

    idx:        (B, S) integer tensor of category ids (assumed in [0, V))
    emb_weight: (V, D) embedding table (padding_idx row already zeroed)
    gamma,beta: (D,)   LayerNorm affine params
    table_strategy: None (auto), "resident", or "gather"
    returns     (B, S, D) in out_dtype (default float32, matching torch)
    """
    B, S = idx.shape
    V, D = emb_weight.shape
    N = B * S

    # ---- lane-dense feature padding (D -> multiple of 128) -----------------
    D_pad = _round_up(D, 128)

    # ---- token tiling (padded with id 0; padded rows sliced off) -----------
    T = min(_round_up(block_tokens, 8), _round_up(N, 8))
    if _round_up(N, T) // T == 1 and T > 8:
        # Split into >= 2 token blocks so both TensorCores (v7x) get work.
        T = max(8, _round_up((N + 1) // 2, 8))
    N_pad = _round_up(N, T)
    n_t = N_pad // T

    idx_flat = idx.reshape(N).astype(jnp.int32)
    if N_pad != N:
        idx_flat = jnp.concatenate(
            [idx_flat, jnp.zeros((N_pad - N,), jnp.int32)])

    emb_w = emb_weight
    if D_pad != D:
        emb_w = jnp.concatenate(
            [emb_w, jnp.zeros((V, D_pad - D), emb_w.dtype)], axis=1)

    gamma_p = jnp.zeros((1, D_pad), jnp.float32).at[0, :D].set(
        gamma.astype(jnp.float32))
    beta_p = jnp.zeros((1, D_pad), jnp.float32).at[0, :D].set(
        beta.astype(jnp.float32))

    inv_d = 1.0 / float(D)                       # true D (padded cols are 0)
    emb_itemsize = jnp.dtype(emb_w.dtype).itemsize
    out_itemsize = jnp.dtype(out_dtype).itemsize
    vmem_ceiling = _vmem_ceiling_bytes()

    # ---- choose table strategy ---------------------------------------------
    V_res = _round_up(V, 128)                    # MXU-friendly contraction dim
    resident_est = (V_res * D_pad * emb_itemsize     # table (fetched once)
                    + T * V_res * 4                  # one-hot intermediate
                    + 3 * T * D_pad * 4              # f32 x + 2x out buffers
                    + 2 * T * 4)                     # ids (double-buffered)
    if table_strategy is None:
        use_resident = resident_est <= int(0.6 * vmem_ceiling)
    else:
        use_resident = table_strategy == "resident"

    if use_resident:
        # ---- Path 1: whole table resident in VMEM, one-hot MXU gather ------
        emb_res = emb_w
        if V_res != V:
            emb_res = jnp.concatenate(
                [emb_res, jnp.zeros((V_res - V, D_pad), emb_res.dtype)],
                axis=0)
        idx2 = idx_flat.reshape(N_pad, 1)

        cost = pl.CostEstimate(
            flops=2 * N_pad * V_res * D_pad + 10 * N_pad * D_pad,
            transcendentals=N_pad,                   # one rsqrt per token row
            bytes_accessed=(N_pad * 4
                            + V_res * D_pad * emb_itemsize   # table once
                            + 2 * D_pad * 4
                            + N_pad * D_pad * out_itemsize))

        kernel = functools.partial(_resident_kernel, inv_d=inv_d)
        out = pl.pallas_call(
            kernel,
            out_shape=jax.ShapeDtypeStruct((N_pad, D_pad), out_dtype),
            grid_spec=pltpu.PrefetchScalarGridSpec(
                num_scalar_prefetch=0,
                grid=(n_t,),
                in_specs=[
                    pl.BlockSpec((T, 1), lambda i: (i, 0)),           # ids
                    pl.BlockSpec((V_res, D_pad), lambda i: (0, 0)),   # table
                    pl.BlockSpec((1, D_pad), lambda i: (0, 0)),       # gamma
                    pl.BlockSpec((1, D_pad), lambda i: (0, 0)),       # beta
                ],
                out_specs=pl.BlockSpec((T, D_pad), lambda i: (i, 0)),
            ),
            compiler_params=pltpu.CompilerParams(
                dimension_semantics=("parallel",),
                vmem_limit_bytes=int(min(vmem_ceiling,
                                         max(16 * 1024 * 1024,
                                             2 * resident_est)))),
            cost_estimate=cost,
        )(idx2, emb_res, gamma_p, beta_p)
    else:
        # ---- Path 2: table in HBM, manual per-row DMA gather ----------------
        gather_est = (T * D_pad * emb_itemsize        # gathered-row scratch
                      + 3 * T * D_pad * 4             # f32 x + 2x out buffers
                      + 4 * D_pad * 4)
        cost = pl.CostEstimate(
            flops=10 * N_pad * D_pad,
            transcendentals=N_pad,
            bytes_accessed=(N_pad * 4
                            + N_pad * D_pad * emb_itemsize   # only used rows
                            + 2 * D_pad * 4
                            + N_pad * D_pad * out_itemsize))

        kernel = functools.partial(_gather_kernel, inv_d=inv_d,
                                   block_tokens=T)
        out = pl.pallas_call(
            kernel,
            out_shape=jax.ShapeDtypeStruct((N_pad, D_pad), out_dtype),
            grid_spec=pltpu.PrefetchScalarGridSpec(
                num_scalar_prefetch=1,               # ids -> SMEM
                grid=(n_t,),
                in_specs=[
                    pl.BlockSpec(memory_space=pl.ANY),               # table
                    pl.BlockSpec((1, D_pad), lambda i, ids: (0, 0)),  # gamma
                    pl.BlockSpec((1, D_pad), lambda i, ids: (0, 0)),  # beta
                ],
                out_specs=pl.BlockSpec((T, D_pad), lambda i, ids: (i, 0)),
                scratch_shapes=[
                    pltpu.VMEM((T, D_pad), emb_w.dtype),
                    pltpu.SemaphoreType.DMA((1,)),
                ],
            ),
            compiler_params=pltpu.CompilerParams(
                dimension_semantics=("parallel",),
                vmem_limit_bytes=int(min(vmem_ceiling,
                                         max(16 * 1024 * 1024,
                                             2 * gather_est)))),
            cost_estimate=cost,
        )(idx_flat, emb_w, gamma_p, beta_p)

    return out[:N, :D].reshape(B, S, D)


def _reference(idx, emb_weight, gamma, beta):
    x = emb_weight[idx].astype(jnp.float32)
    mu = x.mean(-1, keepdims=True)
    var = ((x - mu) ** 2).mean(-1, keepdims=True)
    return (x - mu) / jnp.sqrt(var + EPS) * gamma + beta


if __name__ == "__main__":
    key = jax.random.PRNGKey(0)
    k_emb, k_idx, k_emb2, k_idx2 = jax.random.split(key, 4)

    # --- Case 1: small shapes consistent with the module (resident path,
    #             D=32 -> lane-padded to 128, token axis split to 2 blocks) --
    num_embeddings, embedding_dim, padding_idx = 16, 32, 0
    B, S = 2, 8

    emb_weight = jax.random.normal(k_emb, (num_embeddings, embedding_dim),
                                   jnp.float32)
    emb_weight = emb_weight.at[padding_idx].set(0.0)  # nn.Embedding padding_idx
    gamma = jnp.ones((embedding_dim,), jnp.float32)   # nn.LayerNorm defaults
    beta = jnp.zeros((embedding_dim,), jnp.float32)
    idx = jax.random.randint(k_idx, (B, S), 0, num_embeddings, jnp.int32)

    out = category_value_encoder(idx, emb_weight, gamma, beta)
    jax.block_until_ready(out)
    ref = _reference(idx, emb_weight, gamma, beta)
    assert out.shape == (B, S, embedding_dim)
    assert jnp.allclose(out, ref, atol=1e-4, rtol=1e-4)

    # --- Case 2: larger vocab + token padding (auto -> resident path) -------
    V2, D2 = 1000, 128
    B2, S2 = 4, 96
    emb_weight2 = jax.random.normal(k_emb2, (V2, D2), jnp.float32)
    emb_weight2 = emb_weight2.at[0].set(0.0)
    gamma2 = jnp.ones((D2,), jnp.float32)
    beta2 = jnp.zeros((D2,), jnp.float32)
    idx2 = jax.random.randint(k_idx2, (B2, S2), 0, V2, jnp.int32)

    out2 = category_value_encoder(idx2, emb_weight2, gamma2, beta2)
    jax.block_until_ready(out2)
    ref2 = _reference(idx2, emb_weight2, gamma2, beta2)
    assert out2.shape == (B2, S2, D2)
    assert jnp.allclose(out2, ref2, atol=1e-4, rtol=1e-4)

    # --- Case 3: exercise the HBM-gather path (used automatically when the
    #             table does not fit the VMEM budget) on the same small data --
    out3 = category_value_encoder(idx2, emb_weight2, gamma2, beta2,
                                  table_strategy="gather")
    jax.block_until_ready(out3)
    assert jnp.allclose(out3, ref2, atol=1e-4, rtol=1e-4)

    print("KERNEL_OK")
</pallas_src>

<mosaic_0001>
module attributes {stable_mosaic.version = 11 : i64} {
  func.func @_resident_kernel(%arg0: i32, %arg1: memref<8x1xi32, #tpu.memory_space<vmem>>, %arg2: memref<128x128xf32, #tpu.memory_space<vmem>>, %arg3: memref<1x128xf32, #tpu.memory_space<vmem>>, %arg4: memref<1x128xf32, #tpu.memory_space<vmem>>, %arg5: memref<8x128xf32, #tpu.memory_space<vmem>>) attributes {dimension_semantics = [#tpu.dimension_semantics<parallel>], iteration_bounds = array<i64: 2>, scalar_prefetch = 0 : i64, scratch_operands = 0 : i64, tpu.core_type = #tpu.core_type<tc>, window_params = [{transform_indices = @transform_0, window_bounds = array<i64: 8, 1>}, {pipeline_mode = #tpu.pipeline_mode<synchronous>, transform_indices = @transform_1, window_bounds = array<i64: 128, 128>}, {pipeline_mode = #tpu.pipeline_mode<synchronous>, transform_indices = @transform_2, window_bounds = array<i64: 1, 128>}, {pipeline_mode = #tpu.pipeline_mode<synchronous>, transform_indices = @transform_3, window_bounds = array<i64: 1, 128>}, {transform_indices = @transform_4, window_bounds = array<i64: 8, 128>}]} {
    %c0 = arith.constant 0 : index
    %c0_0 = arith.constant 0 : index
    %0 = vector.load %arg1[%c0, %c0_0] : memref<8x1xi32, #tpu.memory_space<vmem>>, vector<8x1xi32>
    %1 = tpu.iota {dimensions = array<i32: 1>} : vector<8x128xi32>
    %2 = vector.broadcast %0 : vector<8x1xi32> to vector<8x128xi32>
    %3 = arith.cmpi eq, %1, %2 : vector<8x128xi32>
    %4 = arith.extui %3 : vector<8x128xi1> to vector<8x128xi32>
    %5 = arith.sitofp %4 : vector<8x128xi32> to vector<8x128xf32>
    %c0_1 = arith.constant 0 : index
    %c0_2 = arith.constant 0 : index
    %6 = vector.load %arg2[%c0_1, %c0_2] : memref<128x128xf32, #tpu.memory_space<vmem>>, vector<128x128xf32>
    %cst = arith.constant dense<0.000000e+00> : vector<8x128xf32>
    %7 = tpu.matmul %5, %6, %cst {dimension_numbers = #tpu.dot_dimension_numbers<[1], [0], [0], [1], [0, 0, 1, 1], [], []>} : vector<8x128xf32>, vector<128x128xf32>, vector<8x128xf32> -> vector<8x128xf32>
    %cst_3 = arith.constant dense<0.000000e+00> : vector<8xf32>
    %8 = vector.multi_reduction <add>, %7, %cst_3 [1] : vector<8x128xf32> to vector<8xf32>
    %9 = vector.shape_cast %8 : vector<8xf32> to vector<8x1xf32>
    %10 = arith.mulf %7, %7 : vector<8x128xf32>
    %cst_4 = arith.constant dense<0.000000e+00> : vector<8xf32>
    %11 = vector.multi_reduction <add>, %10, %cst_4 [1] : vector<8x128xf32> to vector<8xf32>
    %12 = vector.shape_cast %11 : vector<8xf32> to vector<8x1xf32>
    %cst_5 = arith.constant 3.125000e-02 : f32
    %13 = vector.broadcast %cst_5 : f32 to vector<8x1xf32>
    %14 = arith.mulf %9, %13 : vector<8x1xf32>
    %cst_6 = arith.constant 3.125000e-02 : f32
    %15 = vector.broadcast %cst_6 : f32 to vector<8x1xf32>
    %16 = arith.mulf %12, %15 : vector<8x1xf32>
    %17 = arith.mulf %14, %14 : vector<8x1xf32>
    %18 = arith.subf %16, %17 : vector<8x1xf32>
    %cst_7 = arith.constant 0.000000e+00 : f32
    %19 = vector.broadcast %cst_7 : f32 to vector<8x1xf32>
    %20 = arith.maximumf %18, %19 : vector<8x1xf32>
    %cst_8 = arith.constant 9.99999974E-6 : f32
    %21 = vector.broadcast %cst_8 : f32 to vector<8x1xf32>
    %22 = arith.addf %20, %21 : vector<8x1xf32>
    %23 = math.rsqrt %22 : vector<8x1xf32>
    %24 = vector.broadcast %14 : vector<8x1xf32> to vector<8x128xf32>
    %25 = arith.subf %7, %24 : vector<8x128xf32>
    %26 = vector.broadcast %23 : vector<8x1xf32> to vector<8x128xf32>
    %27 = arith.mulf %25, %26 : vector<8x128xf32>
    %c0_9 = arith.constant 0 : index
    %c0_10 = arith.constant 0 : index
    %28 = vector.load %arg3[%c0_9, %c0_10] : memref<1x128xf32, #tpu.memory_space<vmem>>, vector<1x128xf32>
    %29 = vector.broadcast %28 : vector<1x128xf32> to vector<8x128xf32>
    %30 = arith.mulf %27, %29 : vector<8x128xf32>
    %c0_11 = arith.constant 0 : index
    %c0_12 = arith.constant 0 : index
    %31 = vector.load %arg4[%c0_11, %c0_12] : memref<1x128xf32, #tpu.memory_space<vmem>>, vector<1x128xf32>
    %32 = vector.broadcast %31 : vector<1x128xf32> to vector<8x128xf32>
    %33 = arith.addf %30, %32 : vector<8x128xf32>
    %c0_13 = arith.constant 0 : index
    %c0_14 = arith.constant 0 : index
    %34 = vector.load %arg5[%c0_13, %c0_14] : memref<8x128xf32, #tpu.memory_space<vmem>>, vector<8x128xf32>
    tpu.vector_store %arg5[%c0_13, %c0_14], %33 {strides = array<i32>} : memref<8x128xf32, #tpu.memory_space<vmem>>, vector<8x128xf32>,
    return
  }
  func.func @transform_0(%arg0: i32) -> (i32, i32) {
    %c0_i32 = arith.constant 0 : i32
    %c0_i32_0 = arith.constant 0 : i32
    return %arg0, %c0_i32 : i32, i32
  }
  func.func @transform_1(%arg0: i32) -> (i32, i32) {
    %c0_i32 = arith.constant 0 : i32
    %c0_i32_0 = arith.constant 0 : i32
    %c0_i32_1 = arith.constant 0 : i32
    return %c0_i32, %c0_i32_0 : i32, i32
  }
  func.func @transform_2(%arg0: i32) -> (i32, i32) {
    %c0_i32 = arith.constant 0 : i32
    %c0_i32_0 = arith.constant 0 : i32
    %c0_i32_1 = arith.constant 0 : i32
    return %c0_i32, %c0_i32_0 : i32, i32
  }
  func.func @transform_3(%arg0: i32) -> (i32, i32) {
    %c0_i32 = arith.constant 0 : i32
    %c0_i32_0 = arith.constant 0 : i32
    %c0_i32_1 = arith.constant 0 : i32
    return %c0_i32, %c0_i32_0 : i32, i32
  }
  func.func @transform_4(%arg0: i32) -> (i32, i32) {
    %c0_i32 = arith.constant 0 : i32
    %c0_i32_0 = arith.constant 0 : i32
    return %arg0, %c0_i32 : i32, i32
  }
}

</mosaic_0001>

<llo_original>
// kernel: tpu_custom_call.1
$region0: #{tpu_custom_call.1}
  #allocation0 [shape = 'u32[]', space=smem, size = 0x4, offset = 0x4, fixed_abs, tag = 'smem constant byte address 0x4 - core index']
  #allocation1 [shape = 'u32[144,128]{1,0:T(1,128)}', space=vmem, size = 0x12000, scoped, tag = 'internal scratch']
  %s0 = inlined_call_operand.vmem [shape: s32[16,1], index: 0, kind: input, shape index: {}]
  %s1 = inlined_call_operand.hbm [shape: f32[128,128], index: 1, kind: input, shape index: {}]
  %s2 = inlined_call_operand.vmem [shape: f32[1,128], index: 2, kind: input, shape index: {}]
  %s3 = inlined_call_operand.vmem [shape: f32[1,128], index: 3, kind: input, shape index: {}]
  %s4 = inlined_call_operand.hbm [shape: f32[16,128], index: 4, kind: output, shape index: {}]
  %s5 = sld [smem:[#allocation0]]
  $region53: #{tpu_custom_call.1} parent=0
    _
  %s7 = ssub.s32 1, %s5
  %s8 = scalar_select 0, %s7, %s5
  $region1: #{tpu_custom_call.1} parent=0
    #allocation2 [shape = 'u8[65536]{0}', space=vmem, size = 0x10000, scoped, tag = 'input window, operand 1, single buffered']
    #allocation3 [shape = 's32[2]{0}', space=sflag, size = 0x8, scoped, tag = 'scoped memory for tpu_custom_call.1']
    #allocation4 [shape = 's32[2]{0}', space=sflag, size = 0x8, scoped, tag = 'scoped memory for tpu_custom_call.1']
    #allocation5 [shape = 'u8[8192]{0}', space=vmem, size = 0x2000, scoped, tag = 'output window, operand 0']
    %9 = vsyncpa [#allocation3], 0
    %10 = vsyncpa [#allocation4], 0
    %s11 = scalar_lea.sflag [#allocation4], 1
    %12 = vsyncpa %s11, 0
    loop: start=0, step=1, limit=4
    $region2: #{tpu_custom_call.1} parent=1 // loop_pre_header
      _
    $region3: #{tpu_custom_call.1} parent=1 // loop_header
      %s14 = sphi 0, %s18
      %p15 = scmp.ge.s32.totalorder %s14, 4
      %s24 = sphi 0, %s26
      %s27 = sphi 0, %s24
      %s28 = sphi 0, %s27
      %s44 = sphi 0, %s28
      %s48 = sphi 0, %s48
      %s50 = sphi 0, %s48
      %s51 = sphi 0, %s50
      %s65 = sphi 0, %s51
      %s69 = sphi 0, %s69
      %s71 = sphi 0, %s69
      %s72 = sphi 0, %s71
      %s86 = sphi 0, %s72
      %s90 = sphi 0, %s90
      %s92 = sphi 0, %s90
      %s93 = sphi 0, %s92
      %s107 = sphi 0, %s93
      %s113 = sphi 0, %s115
      %s116 = sphi 0, %s113
      %s117 = sphi 0, %s116
      %s133 = sphi 0, %s117
    $region4: #{tpu_custom_call.1} parent=1 // loop_header_branch
      %17 = sbr.rel (%p15) target = $region8
    $region5: #{tpu_custom_call.1} parent=1 // loop_body
      %s19 = ssub.s32 %s14, 1
      %s20 = ssub.s32 %s14, 2
      %s21 = sadd.s32 %s14, 1
      %s22 = ssub.s32 %s14, %s21
      %p23 = scmp.eq.s32.totalorder %s22, 0
      %s25 = sadd.s32 %s24, 1
      %s26 = scalar_select %p23, %s24, %s25
      %p29 = pneg %p23
      %p30 = scmp.eq.s32.totalorder %s14, 1
      %p31 = por %p29, %p30
      %p32 = scmp.ne.s32.totalorder %s24, %s27
      %p33 = scmp.eq.s32.totalorder %s14, 0
      %p34 = por %p32, %p33
      %p35 = scmp.ne.s32.totalorder %s24, %s27
      %p36 = scmp.eq.s32.totalorder %s19, 1
      %p37 = por %p35, %p36
      %p38 = scmp.ne.s32.totalorder %s27, %s28
      %p39 = scmp.eq.s32.totalorder %s19, 0
      %p40 = por %p38, %p39
      %p41 = scmp.ne.s32.totalorder %s27, %s28
      %p42 = scmp.eq.s32.totalorder %s20, 1
      %p43 = por %p41, %p42
      %p45 = scmp.ne.s32.totalorder %s28, %s44
      %p46 = scmp.eq.s32.totalorder %s20, 0
      %p47 = por %p45, %p46
      %s49 = sadd.s32 %s48, 1
      %p52 = scmp.eq.s32.totalorder %s14, 1
      %p53 = scmp.ne.s32.totalorder %s48, %s50
      %p54 = scmp.eq.s32.totalorder %s14, 0
      %p55 = por %p53, %p54
      %p56 = scmp.ne.s32.totalorder %s48, %s50
      %p57 = scmp.eq.s32.totalorder %s19, 1
      %p58 = por %p56, %p57
      %p59 = scmp.ne.s32.totalorder %s50, %s51
      %p60 = scmp.eq.s32.totalorder %s19, 0
      %p61 = por %p59, %p60
      %p62 = scmp.ne.s32.totalorder %s50, %s51
      %p63 = scmp.eq.s32.totalorder %s20, 1
      %p64 = por %p62, %p63
      %p66 = scmp.ne.s32.totalorder %s51, %s65
      %p67 = scmp.eq.s32.totalorder %s20, 0
      %p68 = por %p66, %p67
      %s70 = sadd.s32 %s69, 1
      %p73 = scmp.eq.s32.totalorder %s14, 1
      %p74 = scmp.ne.s32.totalorder %s69, %s71
      %p75 = scmp.eq.s32.totalorder %s14, 0
      %p76 = por %p74, %p75
      %p77 = scmp.ne.s32.totalorder %s69, %s71
      %p78 = scmp.eq.s32.totalorder %s19, 1
      %p79 = por %p77, %p78
      %p80 = scmp.ne.s32.totalorder %s71, %s72
      %p81 = scmp.eq.s32.totalorder %s19, 0
      %p82 = por %p80, %p81
      %p83 = scmp.ne.s32.totalorder %s71, %s72
      %p84 = scmp.eq.s32.totalorder %s20, 1
      %p85 = por %p83, %p84
      %p87 = scmp.ne.s32.totalorder %s72, %s86
      %p88 = scmp.eq.s32.totalorder %s20, 0
      %p89 = por %p87, %p88
      %s91 = sadd.s32 %s90, 1
      %p94 = scmp.eq.s32.totalorder %s14, 1
      %p95 = scmp.ne.s32.totalorder %s90, %s92
      %p96 = scmp.eq.s32.totalorder %s14, 0
      %p97 = por %p95, %p96
      %p98 = scmp.ne.s32.totalorder %s90, %s92
      %p99 = scmp.eq.s32.totalorder %s19, 1
      %p100 = por %p98, %p99
      %p101 = scmp.ne.s32.totalorder %s92, %s93
      %p102 = scmp.eq.s32.totalorder %s19, 0
      %p103 = por %p101, %p102
      %p104 = scmp.ne.s32.totalorder %s92, %s93
      %p105 = scmp.eq.s32.totalorder %s20, 1
      %p106 = por %p104, %p105
      %p108 = scmp.ne.s32.totalorder %s93, %s107
      %p109 = scmp.eq.s32.totalorder %s20, 0
      %p110 = por %p108, %p109
      %s111 = ssub.s32 %s14, %s21
      %p112 = scmp.eq.s32.totalorder %s111, 0
      %s114 = sadd.s32 %s113, 1
      %s115 = scalar_select %p112, %s113, %s114
      %p118 = pneg %p112
      %p119 = scmp.eq.s32.totalorder %s14, 1
      %p120 = por %p118, %p119
      %p121 = scmp.ne.s32.totalorder %s113, %s116
      %p122 = scmp.eq.s32.totalorder %s14, 0
      %p123 = por %p121, %p122
      %p124 = scmp.ne.s32.totalorder %s113, %s116
      %p125 = scmp.eq.s32.totalorder %s19, 1
      %p126 = por %p124, %p125
      %p127 = scmp.ne.s32.totalorder %s116, %s117
      %p128 = scmp.eq.s32.totalorder %s19, 0
      %p129 = por %p127, %p128
      %p130 = scmp.ne.s32.totalorder %s116, %s117
      %p131 = scmp.eq.s32.totalorder %s20, 1
      %p132 = por %p130, %p131
      %p134 = scmp.ne.s32.totalorder %s117, %s133
      %p135 = scmp.eq.s32.totalorder %s20, 0
      %p136 = por %p134, %p135
      %p137 = scmp.le.s32.totalorder 1, %s14
      %p138 = scmp.lt.s32.totalorder %s14, 3
      %p139 = pnand %p137, %p138
      %p140 = pneg %p139
      // Predicated region
      $region9: #{tpu_custom_call.1} parent=5 // pred_check
        _
      $region10: #{tpu_custom_call.1} parent=5 // pred_check_branch
        %142 = sbr.rel (%p139) target = $region12
      $region11: #{tpu_custom_call.1} parent=5 // pred_region
        %s143 = ssub.s32 %s14, 1
        // Predicated region
        $region13: #{tpu_custom_call.1} parent=11 // pred_check
          %p144 = pneg %p61
        $region14: #{tpu_custom_call.1} parent=11 // pred_check_branch
          %146 = sbr.rel (%p144) target = $region16
        $region15: #{tpu_custom_call.1} parent=11 // pred_region
          %s148 = ssub.s32 2048, 2048
          %149 = vsyncadd [#allocation3], %s148
          %s150 = sshll.u32 [#allocation2], 4
          %s151 = int_to_ptr.vmem [resolvable:$true] %s150
          %156 = dma.hbm_to_vmem [thread:$0]  %s1, 2048, %s151, [#allocation3], 128, 128, 8
        $region16: #{tpu_custom_call.1} parent=11 // pred_fallthru
          _
        // Predicated region
        $region17: #{tpu_custom_call.1} parent=11 // pred_check
          %p157 = pneg %p82
        $region18: #{tpu_custom_call.1} parent=11 // pred_check_branch
          %159 = sbr.rel (%p157) target = $region20
        $region19: #{tpu_custom_call.1} parent=11 // pred_region
          _
        $region20: #{tpu_custom_call.1} parent=11 // pred_fallthru
          _
        // Predicated region
        $region21: #{tpu_custom_call.1} parent=11 // pred_check
          %p160 = pneg %p103
        $region22: #{tpu_custom_call.1} parent=11 // pred_check_branch
          %162 = sbr.rel (%p160) target = $region24
        $region23: #{tpu_custom_call.1} parent=11 // pred_region
          _
        $region24: #{tpu_custom_call.1} parent=11 // pred_fallthru
          _
      $region12: #{tpu_custom_call.1} parent=5 // pred_fallthru
        _
      %p163 = scmp.lt.s32.totalorder %s14, 2
      // Predicated region
      $region25: #{tpu_custom_call.1} parent=5 // pred_check
        %p164 = pneg %p163
      $region26: #{tpu_custom_call.1} parent=5 // pred_check_branch
        %166 = sbr.rel (%p164) target = $region28
      $region27: #{tpu_custom_call.1} parent=5 // pred_region
        // Predicated region
        $region29: #{tpu_custom_call.1} parent=27 // pred_check
          %p167 = pneg %p34
        $region30: #{tpu_custom_call.1} parent=27 // pred_check_branch
          %169 = sbr.rel (%p167) target = $region32
        $region31: #{tpu_custom_call.1} parent=27 // pred_region
          %p170 = scmp.lt.s32.totalorder %s14, 1
          %s171 = scalar_select %p170, %s14, 1
          %s172 = smul.addr %s171, 8
          %s173 = scalar_lea.vmem %s0, %s172
        $region32: #{tpu_custom_call.1} parent=27 // pred_fallthru
          _
      $region28: #{tpu_custom_call.1} parent=5 // pred_fallthru
        _
      %p174 = scmp.le.s32.totalorder 1, %s14
      %p175 = scmp.lt.s32.totalorder %s14, 3
      %p176 = pnand %p174, %p175
      %p177 = pneg %p176
      // Predicated region
      $region33: #{tpu_custom_call.1} parent=5 // pred_check
        _
      $region34: #{tpu_custom_call.1} parent=5 // pred_check_branch
        %179 = sbr.rel (%p176) target = $region36
      $region35: #{tpu_custom_call.1} parent=5 // pred_region
        %s180 = ssub.s32 %s14, 1
        // Predicated region
        $region37: #{tpu_custom_call.1} parent=35 // pred_check
          %p181 = pneg %p61
        $region38: #{tpu_custom_call.1} parent=35 // pred_check_branch
          %183 = sbr.rel (%p181) target = $region40
        $region39: #{tpu_custom_call.1} parent=35 // pred_region
          %184 = dma.done [#allocation3], 2048
        $region40: #{tpu_custom_call.1} parent=35 // pred_fallthru
          _
        %p185 = scmp.lt.s32.totalorder %s19, 1
        %s186 = scalar_select %p185, %s19, 1
        %s187 = smul.addr %s186, 8
        %s188 = scalar_lea.vmem %s0, %s187
        %p189 = pneg %p40
        %p190 = pneg %p37
        %p191 = pneg %p61
        %p192 = pneg %p58
        %p193 = pneg %p82
        %p194 = pneg %p79
        %p195 = pneg %p103
        %p196 = pneg %p100
        %p197 = pneg %p129
        %p198 = pneg %p126
        %s199 = sand.u32 %s116, 1
        %s200 = scalar_lea.sflag [#allocation4], %s199
        %s201 = sand.u32 %s116, 1
        %s202 = smul.addr %s201, 8
        %s203 = scalar_lea.vmem [#allocation5], %s202
        %p204 = scmp.lt.s32.totalorder %s19, 1
        %s205 = scalar_select %p204, %s19, 1
        %s206 = smul.addr %s205, 8
        %s207 = scalar_lea.vmem %s0, %s206
        %v208 = vld [vmem:[%s207] sm:$0xff]
        %v209 = vlaneseq
        %v210 = vand.u32 %v209, 127
        %211 = vset.pattern.permute.xlu0 0
        %212 = vperm.xlu0 %211, %v208
        %v213 = vpop.permute.xlu0 %212
        %vm214 = vcmp.eq.s32.totalorder %v210, %v213
        %v215 = vsel %vm214, 1, 0
        %v216 = vcvt.s32.f32 %v215
        %v217 = vld [vmem:[#allocation2] sm:$0xff]
        %v218 = vld [vmem:[#allocation2 + $0x8] sm:$0xff]
        %v219 = vld [vmem:[#allocation2 + $0x10] sm:$0xff]
        %v220 = vld [vmem:[#allocation2 + $0x18] sm:$0xff]
        %v221 = vld [vmem:[#allocation2 + $0x20] sm:$0xff]
        %v222 = vld [vmem:[#allocation2 + $0x28] sm:$0xff]
        %v223 = vld [vmem:[#allocation2 + $0x30] sm:$0xff]
        %v224 = vld [vmem:[#allocation2 + $0x38] sm:$0xff]
        %v225 = vld [vmem:[#allocation2 + $0x40] sm:$0xff]
        %v226 = vld [vmem:[#allocation2 + $0x48] sm:$0xff]
        %v227 = vld [vmem:[#allocation2 + $0x50] sm:$0xff]
        %v228 = vld [vmem:[#allocation2 + $0x58] sm:$0xff]
        %v229 = vld [vmem:[#allocation2 + $0x60] sm:$0xff]
        %v230 = vld [vmem:[#allocation2 + $0x68] sm:$0xff]
        %v231 = vld [vmem:[#allocation2 + $0x70] sm:$0xff]
        %v232 = vld [vmem:[#allocation2 + $0x78] sm:$0xff]
        %233 = vmatprep.subr.mxu0 0.0
        %234 = vmatpush1.msra.mxu0 %v232
        %235 = vmatprep.subr.mxu0 0.0
        %236 = vmatpush1.msra.mxu0 %v231
        %237 = vmatprep.subr.mxu0 0.0
        %238 = vmatpush1.msra.mxu0 %v230
        %239 = vmatprep.subr.mxu0 0.0
        %240 = vmatpush1.msra.mxu0 %v229
        %241 = vmatprep.subr.mxu0 0.0
        %242 = vmatpush1.msra.mxu0 %v228
        %243 = vmatprep.subr.mxu0 0.0
        %244 = vmatpush1.msra.mxu0 %v227
        %245 = vmatprep.subr.mxu0 0.0
        %246 = vmatpush1.msra.mxu0 %v226
        %247 = vmatprep.subr.mxu0 0.0
        %248 = vmatpush1.msra.mxu0 %v225
        %249 = vmatprep.subr.mxu0 0.0
        %250 = vmatpush1.msra.mxu0 %v224
        %251 = vmatprep.subr.mxu0 0.0
        %252 = vmatpush1.msra.mxu0 %v223
        %253 = vmatprep.subr.mxu0 0.0
        %254 = vmatpush1.msra.mxu0 %v222
        %255 = vmatprep.subr.mxu0 0.0
        %256 = vmatpush1.msra.mxu0 %v221
        %257 = vmatprep.subr.mxu0 0.0
        %258 = vmatpush1.msra.mxu0 %v220
        %259 = vmatprep.subr.mxu0 0.0
        %260 = vmatpush1.msra.mxu0 %v219
        %261 = vmatprep.subr.mxu0 0.0
        %262 = vmatpush1.msra.mxu0 %v218
        %263 = vmatprep.subr.mxu0 0.0
        %264 = vmatpush1.msra.mxu0 %v217
        %265 = vmatprep.subr.mxu0 0.0
        %266 = vmatpush2.msra.mxu0 0.0
        %267 = vmatprep.subr.mxu0 0.0
        %268 = vmatpush2.msra.mxu0 0.0
        %269 = vmatprep.subr.mxu0 0.0
        %270 = vmatpush2.msra.mxu0 0.0
        %271 = vmatprep.subr.mxu0 0.0
        %272 = vmatpush2.msra.mxu0 0.0
        %273 = vmatprep.subr.mxu0 0.0
        %274 = vmatpush2.msra.mxu0 0.0
        %275 = vmatprep.subr.mxu0 0.0
        %276 = vmatpush2.msra.mxu0 0.0
        %277 = vmatprep.subr.mxu0 0.0
        %278 = vmatpush2.msra.mxu0 0.0
        %279 = vmatprep.subr.mxu0 0.0
        %280 = vmatpush2.msra.mxu0 0.0
        %281 = vmatprep.subr.mxu0 0.0
        %282 = vmatpush2.msra.mxu0 0.0
        %283 = vmatprep.subr.mxu0 0.0
        %284 = vmatpush2.msra.mxu0 0.0
        %285 = vmatprep.subr.mxu0 0.0
        %286 = vmatpush2.msra.mxu0 0.0
        %287 = vmatprep.subr.mxu0 0.0
        %288 = vmatpush2.msra.mxu0 0.0
        %289 = vmatprep.subr.mxu0 0.0
        %290 = vmatpush2.msra.mxu0 0.0
        %291 = vmatprep.subr.mxu0 0.0
        %292 = vmatpush2.msra.mxu0 0.0
        %293 = vmatprep.subr.mxu0 0.0
        %294 = vmatpush2.msra.mxu0 0.0
        %295 = vmatprep.subr.mxu0 0.0
        %296 = vmatpush2.msra.mxu0 0.0
        %297 = vmatprep.mubr.f32.mxu0 0.0
        %298 = vmatmul.mubr.f32.gmra.mxu0 %v216
        %v299 = vpop.f32.mrf.mxu0
        %v300 = vadd.f32 0.0, %v299
        %v301 = vpop.f32.mrf.mxu0
        %302 = vdwg.mxu0
        %303 = vadd.xlane.f32.xlu0 %v300
        %v304 = vpop.xlane.xlu0 %303
        %v305 = vmul.f32 %v300, %v300
        %306 = vadd.xlane.f32.xlu0 %v305
        %v307 = vpop.xlane.xlu0 %306
        %v308 = vmul.f32 %v304, 0.03125
        %v309 = vmul.f32 %v307, 0.03125
        %v310 = vmul.f32 %v308, %v308
        %v311 = vsub.f32 %v309, %v310
        %v312 = vmax.f32 %v311, 0.0
        %v313 = vadd.f32 %v312, 1e-05
        %v314 = vrsqrt.pop %v313
        %v315 = vsub.f32 %v300, %v308
        %v316 = vmul.f32 %v315, %v314
        %v317 = vld [vmem:[%s2] sm:$0x1]
        %v319 = vlaneseq
        %v320 = vshrl.u32 %v319, 7
        %v321 = vsub.s32 0, %v320
        %v322 = vrot.slane %v317, %v321
        %v324 = vmul.f32 %v316, %v322
        %v325 = vld [vmem:[%s3] sm:$0x1]
        %v327 = vlaneseq
        %v328 = vshrl.u32 %v327, 7
        %v329 = vsub.s32 0, %v328
        %v330 = vrot.slane %v325, %v329
        %v332 = vadd.f32 %v324, %v330
        %333 = vst [vmem:[%s203] sm:$0xff] %v332
        %s334 = sand.u32 %s116, 1
        %s335 = scalar_lea.sflag [#allocation4], %s334
        %s336 = sand.u32 %s116, 1
        %s337 = smul.addr %s336, 8
        %s338 = scalar_lea.vmem [#allocation5], %s337
        // Predicated region
        $region41: #{tpu_custom_call.1} parent=35 // pred_check
          %p339 = pneg %p126
        $region42: #{tpu_custom_call.1} parent=35 // pred_check_branch
          %341 = sbr.rel (%p339) target = $region44
        $region43: #{tpu_custom_call.1} parent=35 // pred_region
          %s343 = ssub.s32 128, 128
          %344 = vsyncadd %s335, %s343
          %s345 = smul.addr %s19, 128
          %s346 = scalar_lea.hbm %s4, %s345
          %s348 = sshll.u32 %s338, 4
          %s349 = int_to_ptr.vmem [resolvable:$true] %s348
          %351 = dma.vmem_to_hbm [thread:$0]  %s349, 128, %s346, %s335
        $region44: #{tpu_custom_call.1} parent=35 // pred_fallthru
          _
      $region36: #{tpu_custom_call.1} parent=5 // pred_fallthru
        _
      %p352 = scmp.le.s32.totalorder 2, %s14
      // Predicated region
      $region45: #{tpu_custom_call.1} parent=5 // pred_check
        %p353 = pneg %p352
      $region46: #{tpu_custom_call.1} parent=5 // pred_check_branch
        %355 = sbr.rel (%p353) target = $region48
      $region47: #{tpu_custom_call.1} parent=5 // pred_region
        %s356 = ssub.s32 %s14, 2
        // Predicated region
        $region49: #{tpu_custom_call.1} parent=47 // pred_check
          %p357 = pneg %p132
        $region50: #{tpu_custom_call.1} parent=47 // pred_check_branch
          %359 = sbr.rel (%p357) target = $region52
        $region51: #{tpu_custom_call.1} parent=47 // pred_region
          %s360 = sand.u32 %s117, 1
          %s361 = scalar_lea.sflag [#allocation4], %s360
          %s362 = sand.u32 %s117, 1
          %s363 = smul.addr %s362, 8
          %s364 = scalar_lea.vmem [#allocation5], %s363
          %365 = dma.done %s361, 128
        $region52: #{tpu_custom_call.1} parent=47 // pred_fallthru
          _
      $region48: #{tpu_custom_call.1} parent=5 // pred_fallthru
        _
    $region6: #{tpu_custom_call.1} parent=1 // loop_footer
      %s18 = sadd.s32 1, %s14
    $region7: #{tpu_custom_call.1} parent=1 // loop_footer_branch
      %13 = sbr.rel target = $region3
    $region8: #{tpu_custom_call.1} parent=1 // loop_exit
      _
    %366 = vsyncpa [#allocation3], 1
    %s367 = scalar_lea.sflag [#allocation3], 1
    %368 = vsyncpa %s367, 1
    %369 = vsyncpa [#allocation4], 1
    %s370 = scalar_lea.sflag [#allocation4], 1
    %371 = vsyncpa %s370, 1

</llo_original>
